<compile_context>
chip_gen: v5e
topology: v5e:2x2
jax: 0.10.0
libtpu: 0.0.40
codegen_flags: <defaults>
</compile_context>

<pallas_src>
from typing import NamedTuple

import jax
import jax.numpy as jnp
from jax.experimental import pallas as pl
from jax.experimental.pallas import tpu as pltpu


# --------------------------------------------------------------------------
# Helpers
# --------------------------------------------------------------------------
def _round_up(x, m):
    return (x + m - 1) // m * m


def _vmem_budget_bytes():
    """Physical VMEM minus headroom for Mosaic internal scratch / spills."""
    try:
        cap = int(pltpu.get_tpu_info().vmem_capacity_bytes)
    except Exception:
        cap = 64 << 20            # conservative fallback (v7x per-TC size)
    return (cap * 3) // 4          # ~48 MiB on v7x, ~96 MiB on v5e/v6e


def _divisor_tile(dim_p, max_tile=512):
    """Largest multiple-of-128 tile <= max_tile that divides dim_p exactly."""
    t = min(max_tile, dim_p)
    while dim_p % t != 0:
        t -= 128
    return t


class FoldedLinearBlock(NamedTuple):
    w_p: jax.Array    # [ni_p, nf_p], compute dtype, BN folded, zero-padded
    b_p: jax.Array    # [1, nf_p], f32, BN folded, zero-padded
    ni: int
    nf: int


def prepare_linear_block_params(gamma, beta, running_mean, running_var,
                                weight, bias, eps=1e-5,
                                compute_dtype=jnp.bfloat16):
    """Fold BN (running stats + affine) into the Linear layer and pad to
    lane-dense shapes.  Call once per layer and cache the result."""
    nf, ni = weight.shape
    scale = gamma / jnp.sqrt(running_var + eps)           # [ni]
    shift = beta - running_mean * scale                   # [ni]
    w_folded = scale[:, None] * weight.T                  # [ni, nf]  (f32)
    b_folded = shift @ weight.T + bias                    # [nf]      (f32)

    ni_p = _round_up(ni, 128)
    nf_p = _round_up(nf, 128)
    w_p = jnp.zeros((ni_p, nf_p), compute_dtype).at[:ni, :nf].set(
        w_folded.astype(compute_dtype))
    b_p = jnp.zeros((1, nf_p), jnp.float32).at[0, :nf].set(
        b_folded.astype(jnp.float32))
    return FoldedLinearBlock(w_p=w_p, b_p=b_p, ni=ni, nf=nf)


# --------------------------------------------------------------------------
# Kernels
# --------------------------------------------------------------------------
def _resident_kernel(x_ref, w_ref, b_ref, o_ref):
    # Folded W resident in VMEM; pure MXU matmul + f32 bias epilogue.
    acc = jnp.dot(x_ref[...], w_ref[...], preferred_element_type=jnp.float32)
    o_ref[...] = (acc + b_ref[...]).astype(o_ref.dtype)


def _tiled_kernel(x_ref, w_ref, b_ref, o_ref, acc_ref):
    # Grid = (rows, nf tiles, ni tiles); ni (contraction) is the last axis.
    k = pl.program_id(2)

    @pl.when(k == 0)
    def _():
        acc_ref[...] = jnp.zeros_like(acc_ref)

    acc_ref[...] += jnp.dot(x_ref[...], w_ref[...],
                            preferred_element_type=jnp.float32)

    @pl.when(k == pl.num_programs(2) - 1)
    def _():
        o_ref[...] = (acc_ref[...] + b_ref[...]).astype(o_ref.dtype)


# --------------------------------------------------------------------------
# Wrapper
# --------------------------------------------------------------------------
def linear_block_apply(x, params: FoldedLinearBlock, *, block_rows=None,
                       out_dtype=None, compute_dtype=jnp.bfloat16):
    """x: [N, ni].  Returns [N, nf] in out_dtype (default: x.dtype)."""
    n, ni = x.shape
    assert ni == params.ni, "input feature dim mismatch with prepared params"
    ni_p, nf_p = params.w_p.shape
    nf = params.nf
    out_dtype = x.dtype if out_dtype is None else out_dtype

    in_bytes = jnp.dtype(compute_dtype).itemsize
    out_bytes = jnp.dtype(out_dtype).itemsize
    budget = _vmem_budget_bytes()

    # Row tile: bf16 packs 16 rows/vreg; 256/512-row tiles keep the MXU fed.
    if block_rows is None:
        block_rows = 512 if budget >= (72 << 20) else 256
    n_pad = _round_up(n, 16)                 # pad only to the sublane pack
    tm = min(block_rows, n_pad)
    grid_rows = pl.cdiv(n_pad, tm)           # ragged final block is masked

    if n_pad == n and ni_p == ni and x.dtype == compute_dtype:
        x_p = x
    else:
        x_p = jnp.zeros((n_pad, ni_p), compute_dtype).at[:n, :ni].set(
            x.astype(compute_dtype))

    w_p = params.w_p if params.w_p.dtype == compute_dtype else \
        params.w_p.astype(compute_dtype)
    b_p = params.b_p

    cost = pl.CostEstimate(
        flops=2 * n_pad * ni_p * nf_p,
        transcendentals=0,
        bytes_accessed=(n_pad * ni_p * in_bytes + ni_p * nf_p * in_bytes
                        + nf_p * 4 + n_pad * nf_p * out_bytes),
    )

    # ---- Path selection: does the folded W fit resident in VMEM? ----------
    resident_vmem = (ni_p * nf_p * in_bytes           # W (single-buffered)
                     + nf_p * 4                       # bias
                     + 2 * tm * ni_p * in_bytes       # x tiles (dbl-buffered)
                     + 2 * tm * nf_p * out_bytes)     # out tiles
    use_resident = int(1.25 * resident_vmem) <= budget

    if use_resident:
        vmem_limit = min(max(int(1.5 * resident_vmem), 8 << 20), budget)

        def call(single_buffer_params):
            if single_buffer_params:
                # Constant index_map -> never re-fetched; 2nd buffer is waste.
                w_spec = pl.BlockSpec((ni_p, nf_p), lambda i: (0, 0),
                                      pipeline_mode=pl.Buffered(1))
                b_spec = pl.BlockSpec((1, nf_p), lambda i: (0, 0),
                                      pipeline_mode=pl.Buffered(1))
            else:
                w_spec = pl.BlockSpec((ni_p, nf_p), lambda i: (0, 0))
                b_spec = pl.BlockSpec((1, nf_p), lambda i: (0, 0))
            return pl.pallas_call(
                _resident_kernel,
                out_shape=jax.ShapeDtypeStruct((n_pad, nf_p), out_dtype),
                grid_spec=pltpu.PrefetchScalarGridSpec(
                    num_scalar_prefetch=0,
                    grid=(grid_rows,),
                    in_specs=[
                        pl.BlockSpec((tm, ni_p), lambda i: (i, 0)),   # x tile
                        w_spec,                                       # W
                        b_spec,                                       # bias
                    ],
                    out_specs=pl.BlockSpec((tm, nf_p), lambda i: (i, 0)),
                ),
                compiler_params=pltpu.CompilerParams(
                    dimension_semantics=("parallel",),
                    vmem_limit_bytes=vmem_limit,
                ),
                cost_estimate=cost,
            )(x_p, w_p, b_p)

        try:
            out = call(True)       # single-buffer the pinned W / bias
        except Exception:
            out = call(False)      # fallback if Buffered(1) is unsupported
    else:
        # Tiled fallback: W does not fit resident.  Tiles must divide the
        # padded dims exactly so no garbage is accumulated along ni.
        tn = _divisor_tile(nf_p, 512)
        tk = _divisor_tile(ni_p, 512)
        tiled_vmem = (2 * tm * tk * in_bytes + 2 * tk * tn * in_bytes
                      + 2 * tn * 4 + 2 * tm * tn * out_bytes
                      + tm * tn * 4)                      # f32 accumulator
        vmem_limit = min(max(int(1.5 * tiled_vmem), 8 << 20), budget)
        out = pl.pallas_call(
            _tiled_kernel,
            out_shape=jax.ShapeDtypeStruct((n_pad, nf_p), out_dtype),
            grid_spec=pltpu.PrefetchScalarGridSpec(
                num_scalar_prefetch=0,
                grid=(grid_rows, nf_p // tn, ni_p // tk),
                in_specs=[
                    pl.BlockSpec((tm, tk), lambda i, j, k: (i, k)),
                    pl.BlockSpec((tk, tn), lambda i, j, k: (k, j)),
                    pl.BlockSpec((1, tn), lambda i, j, k: (0, j)),
                ],
                out_specs=pl.BlockSpec((tm, tn), lambda i, j, k: (i, j)),
                scratch_shapes=[pltpu.VMEM((tm, tn), jnp.float32)],
            ),
            compiler_params=pltpu.CompilerParams(
                dimension_semantics=("parallel", "parallel", "arbitrary"),
                vmem_limit_bytes=vmem_limit,
            ),
            cost_estimate=cost,
        )(x_p, w_p, b_p)

    return out[:n, :nf]


def linear_block(x, gamma, beta, running_mean, running_var, weight, bias,
                 eps=1e-5, block_rows=None, out_dtype=None,
                 compute_dtype=jnp.bfloat16):
    """One-shot convenience wrapper (prefer prepare_* + apply and cache the
    prepared params when calling the same layer repeatedly)."""
    params = prepare_linear_block_params(gamma, beta, running_mean,
                                         running_var, weight, bias, eps=eps,
                                         compute_dtype=compute_dtype)
    return linear_block_apply(x, params, block_rows=block_rows,
                              out_dtype=out_dtype, compute_dtype=compute_dtype)


# --------------------------------------------------------------------------
# Self-test
# --------------------------------------------------------------------------
if __name__ == "__main__":
    # Small shapes implied by the module: x [N, ni], Linear(ni -> nf).
    N, NI, NF = 8, 32, 64

    key = jax.random.PRNGKey(0)
    kx, kw, kb, kg, kbe, km, kv = jax.random.split(key, 7)

    x = jax.random.normal(kx, (N, NI), dtype=jnp.float32)

    # Deterministic parameter init (nn.Linear / nn.BatchNorm1d shapes).
    weight = jax.random.normal(kw, (NF, NI), dtype=jnp.float32) * 0.05
    bias = jax.random.normal(kb, (NF,), dtype=jnp.float32) * 0.05
    gamma = 1.0 + 0.1 * jax.random.normal(kg, (NI,), dtype=jnp.float32)
    beta = 0.1 * jax.random.normal(kbe, (NI,), dtype=jnp.float32)
    running_mean = 0.1 * jax.random.normal(km, (NI,), dtype=jnp.float32)
    running_var = 1.0 + 0.1 * jax.random.uniform(kv, (NI,), dtype=jnp.float32)

    eps = 1e-5
    # One-time (cacheable) host-side fold of BN into the Linear layer.
    params = prepare_linear_block_params(gamma, beta, running_mean,
                                         running_var, weight, bias, eps=eps)
    out = linear_block_apply(x, params)
    out = jax.block_until_ready(out)

    # Pure-JAX f32 reference (kernel computes bf16 + f32 accumulate, so use a
    # bf16-appropriate tolerance).
    x_bn = (x - running_mean) / jnp.sqrt(running_var + eps) * gamma + beta
    ref = x_bn @ weight.T + bias
    assert out.shape == (N, NF)
    assert out.dtype == x.dtype
    assert jnp.allclose(out, ref, atol=2e-2, rtol=2e-2)

    print("KERNEL_OK")
</pallas_src>

<mosaic_0001>
module attributes {stable_mosaic.version = 11 : i64} {
  func.func @_resident_kernel(%arg0: i32, %arg1: memref<16x128xbf16, #tpu.memory_space<vmem>>, %arg2: memref<128x128xbf16, #tpu.memory_space<vmem>>, %arg3: memref<1x128xf32, #tpu.memory_space<vmem>>, %arg4: memref<16x128xf32, #tpu.memory_space<vmem>>) attributes {dimension_semantics = [#tpu.dimension_semantics<parallel>], iteration_bounds = array<i64: 1>, scalar_prefetch = 0 : i64, scratch_operands = 0 : i64, tpu.core_type = #tpu.core_type<tc>, window_params = [{transform_indices = @transform_0, window_bounds = array<i64: 16, 128>}, {pipeline_mode = #tpu.pipeline_mode<synchronous>, transform_indices = @transform_1, window_bounds = array<i64: 128, 128>}, {pipeline_mode = #tpu.pipeline_mode<synchronous>, transform_indices = @transform_2, window_bounds = array<i64: 1, 128>}, {transform_indices = @transform_3, window_bounds = array<i64: 16, 128>}]} {
    %c0 = arith.constant 0 : index
    %c0_0 = arith.constant 0 : index
    %0 = vector.load %arg1[%c0, %c0_0] : memref<16x128xbf16, #tpu.memory_space<vmem>>, vector<16x128xbf16>
    %c0_1 = arith.constant 0 : index
    %c0_2 = arith.constant 0 : index
    %1 = vector.load %arg2[%c0_1, %c0_2] : memref<128x128xbf16, #tpu.memory_space<vmem>>, vector<128x128xbf16>
    %cst = arith.constant dense<0.000000e+00> : vector<16x128xf32>
    %2 = tpu.matmul %0, %1, %cst {dimension_numbers = #tpu.dot_dimension_numbers<[1], [0], [0], [1], [0, 0, 1, 1], [], []>} : vector<16x128xbf16>, vector<128x128xbf16>, vector<16x128xf32> -> vector<16x128xf32>
    %c0_3 = arith.constant 0 : index
    %c0_4 = arith.constant 0 : index
    %3 = vector.load %arg3[%c0_3, %c0_4] : memref<1x128xf32, #tpu.memory_space<vmem>>, vector<1x128xf32>
    %4 = vector.broadcast %3 : vector<1x128xf32> to vector<16x128xf32>
    %5 = arith.addf %2, %4 : vector<16x128xf32>
    %c0_5 = arith.constant 0 : index
    %c0_6 = arith.constant 0 : index
    %6 = vector.load %arg4[%c0_5, %c0_6] : memref<16x128xf32, #tpu.memory_space<vmem>>, vector<16x128xf32>
    tpu.vector_store %arg4[%c0_5, %c0_6], %5 {strides = array<i32>} : memref<16x128xf32, #tpu.memory_space<vmem>>, vector<16x128xf32>,
    return
  }
  func.func @transform_0(%arg0: i32) -> (i32, i32) {
    %c0_i32 = arith.constant 0 : i32
    %c0_i32_0 = arith.constant 0 : i32
    return %arg0, %c0_i32 : i32, i32
  }
  func.func @transform_1(%arg0: i32) -> (i32, i32) {
    %c0_i32 = arith.constant 0 : i32
    %c0_i32_0 = arith.constant 0 : i32
    %c0_i32_1 = arith.constant 0 : i32
    return %c0_i32, %c0_i32_0 : i32, i32
  }
  func.func @transform_2(%arg0: i32) -> (i32, i32) {
    %c0_i32 = arith.constant 0 : i32
    %c0_i32_0 = arith.constant 0 : i32
    %c0_i32_1 = arith.constant 0 : i32
    return %c0_i32, %c0_i32_0 : i32, i32
  }
  func.func @transform_3(%arg0: i32) -> (i32, i32) {
    %c0_i32 = arith.constant 0 : i32
    %c0_i32_0 = arith.constant 0 : i32
    return %arg0, %c0_i32 : i32, i32
  }
}

module attributes {stable_mosaic.version = 11 : i64} {
  func.func @_resident_kernel(%arg0: i32, %arg1: memref<16x128xbf16, #tpu.memory_space<vmem>>, %arg2: memref<128x128xbf16, #tpu.memory_space<vmem>>, %arg3: memref<1x128xf32, #tpu.memory_space<vmem>>, %arg4: memref<16x128xf32, #tpu.memory_space<vmem>>) attributes {dimension_semantics = [#tpu.dimension_semantics<parallel>], iteration_bounds = array<i64: 1>, scalar_prefetch = 0 : i64, scratch_operands = 0 : i64, tpu.core_type = #tpu.core_type<tc>, window_params = [{transform_indices = @transform_0, window_bounds = array<i64: 16, 128>}, {pipeline_mode = #tpu.pipeline_mode<synchronous>, transform_indices = @transform_1, window_bounds = array<i64: 128, 128>}, {pipeline_mode = #tpu.pipeline_mode<synchronous>, transform_indices = @transform_2, window_bounds = array<i64: 1, 128>}, {transform_indices = @transform_3, window_bounds = array<i64: 16, 128>}]} {
    %c0 = arith.constant 0 : index
    %c0_0 = arith.constant 0 : index
    %0 = vector.load %arg1[%c0, %c0_0] : memref<16x128xbf16, #tpu.memory_space<vmem>>, vector<16x128xbf16>
    %c0_1 = arith.constant 0 : index
    %c0_2 = arith.constant 0 : index
    %1 = vector.load %arg2[%c0_1, %c0_2] : memref<128x128xbf16, #tpu.memory_space<vmem>>, vector<128x128xbf16>
    %cst = arith.constant dense<0.000000e+00> : vector<16x128xf32>
    %2 = tpu.matmul %0, %1, %cst {dimension_numbers = #tpu.dot_dimension_numbers<[1], [0], [0], [1], [0, 0, 1, 1], [], []>} : vector<16x128xbf16>, vector<128x128xbf16>, vector<16x128xf32> -> vector<16x128xf32>
    %c0_3 = arith.constant 0 : index
    %c0_4 = arith.constant 0 : index
    %3 = vector.load %arg3[%c0_3, %c0_4] : memref<1x128xf32, #tpu.memory_space<vmem>>, vector<1x128xf32>
    %4 = vector.broadcast %3 : vector<1x128xf32> to vector<16x128xf32>
    %5 = arith.addf %2, %4 : vector<16x128xf32>
    %c0_5 = arith.constant 0 : index
    %c0_6 = arith.constant 0 : index
    %6 = vector.load %arg4[%c0_5, %c0_6] : memref<16x128xf32, #tpu.memory_space<vmem>>, vector<16x128xf32>
    tpu.vector_store %arg4[%c0_5, %c0_6], %5 {strides = array<i32>} : memref<16x128xf32, #tpu.memory_space<vmem>>, vector<16x128xf32>,
    return
  }
  func.func @transform_0(%arg0: i32) -> (i32, i32) {
    %c0_i32 = arith.constant 0 : i32
    %c0_i32_0 = arith.constant 0 : i32
    return %arg0, %c0_i32 : i32, i32
  }
  func.func @transform_1(%arg0: i32) -> (i32, i32) {
    %c0_i32 = arith.constant 0 : i32
    %c0_i32_0 = arith.constant 0 : i32
    %c0_i32_1 = arith.constant 0 : i32
    return %c0_i32, %c0_i32_0 : i32, i32
  }
  func.func @transform_2(%arg0: i32) -> (i32, i32) {
    %c0_i32 = arith.constant 0 : i32
    %c0_i32_0 = arith.constant 0 : i32
    %c0_i32_1 = arith.constant 0 : i32
    return %c0_i32, %c0_i32_0 : i32, i32
  }
  func.func @transform_3(%arg0: i32) -> (i32, i32) {
    %c0_i32 = arith.constant 0 : i32
    %c0_i32_0 = arith.constant 0 : i32
    return %arg0, %c0_i32 : i32, i32
  }
}

</mosaic_0001>

<llo_original>
// kernel: tpu_custom_call.1
$region0: #{tpu_custom_call.1}
  #allocation0 [shape = 'u32[]', space=smem, size = 0x4, offset = 0x4, fixed_abs, tag = 'smem constant byte address 0x4 - core index']
  #allocation1 [shape = 'u32[72,128]{1,0:T(1,128)}', space=vmem, size = 0x9000, scoped, tag = 'internal scratch']
  %s0 = inlined_call_operand.hbm [shape: bf16[16,128], index: 0, kind: input, shape index: {}]
  %s1 = inlined_call_operand.hbm [shape: bf16[128,128], index: 1, kind: input, shape index: {}]
  %s2 = inlined_call_operand.vmem [shape: f32[1,128], index: 2, kind: input, shape index: {}]
  %s3 = inlined_call_operand.hbm [shape: f32[16,128], index: 3, kind: output, shape index: {}]
  %s4 = sld [smem:[#allocation0]]
  $region30: #{tpu_custom_call.1} parent=0
    _
  %s6 = ssub.s32 1, %s4
  %s7 = scalar_select 0, %s6, %s4
  $region1: #{tpu_custom_call.1} parent=0
    #allocation2 [shape = 'u8[4096]{0}', space=vmem, size = 0x1000, scoped, tag = 'input window, operand 0, single buffered']
    #allocation3 [shape = 's32[1]{0}', space=sflag, size = 0x4, scoped, tag = 'scoped memory for tpu_custom_call.1']
    #allocation4 [shape = 's32[1]{0}', space=sflag, size = 0x4, scoped, tag = 'scoped memory for tpu_custom_call.1']
    #allocation5 [shape = 'u8[32768]{0}', space=vmem, size = 0x8000, scoped, tag = 'input window, operand 1, single buffered']
    #allocation6 [shape = 's32[1]{0}', space=sflag, size = 0x4, scoped, tag = 'scoped memory for tpu_custom_call.1']
    #allocation7 [shape = 'u8[8192]{0}', space=vmem, size = 0x2000, scoped, tag = 'output window, operand 0, single buffered']
    %8 = vsyncpa [#allocation3], 0
    %9 = vsyncpa [#allocation6], 0
    %10 = vsyncpa [#allocation4], 0
    // Predicated region
    $region2: #{tpu_custom_call.1} parent=1 // pred_check
      _
    $region3: #{tpu_custom_call.1} parent=1 // pred_check_branch
      %12 = sbr.rel (0) target = $region5
    $region4: #{tpu_custom_call.1} parent=1 // pred_region
      %14 = vsyncadd [#allocation3], 0
      %s15 = sshll.u32 %s0, 4
      %s16 = int_to_ptr.hbm [resolvable:$true] %s15
      %s17 = sshll.u32 [#allocation2], 4
      %s18 = int_to_ptr.vmem [resolvable:$true] %s17
      %23 = dma.hbm_to_vmem [thread:$0]  %s16, 128, %s18, [#allocation3], 64, 64, 4
    $region5: #{tpu_custom_call.1} parent=1 // pred_fallthru
      _
    // Predicated region
    $region6: #{tpu_custom_call.1} parent=1 // pred_check
      _
    $region7: #{tpu_custom_call.1} parent=1 // pred_check_branch
      %25 = sbr.rel (0) target = $region9
    $region8: #{tpu_custom_call.1} parent=1 // pred_region
      %27 = vsyncadd [#allocation6], 0
      %s28 = sshll.u32 %s1, 4
      %s29 = int_to_ptr.hbm [resolvable:$true] %s28
      %s30 = sshll.u32 [#allocation5], 4
      %s31 = int_to_ptr.vmem [resolvable:$true] %s30
      %36 = dma.hbm_to_vmem [thread:$0]  %s29, 1024, %s31, [#allocation6], 64, 64, 4
    $region9: #{tpu_custom_call.1} parent=1 // pred_fallthru
      _
    // Predicated region
    $region10: #{tpu_custom_call.1} parent=1 // pred_check
      _
    $region11: #{tpu_custom_call.1} parent=1 // pred_check_branch
      %38 = sbr.rel (0) target = $region13
    $region12: #{tpu_custom_call.1} parent=1 // pred_region
      _
    $region13: #{tpu_custom_call.1} parent=1 // pred_fallthru
      _
    // Predicated region
    $region14: #{tpu_custom_call.1} parent=1 // pred_check
      _
    $region15: #{tpu_custom_call.1} parent=1 // pred_check_branch
      %40 = sbr.rel (0) target = $region17
    $region16: #{tpu_custom_call.1} parent=1 // pred_region
      %42 = dma.done [#allocation3], 128
    $region17: #{tpu_custom_call.1} parent=1 // pred_fallthru
      _
    // Predicated region
    $region18: #{tpu_custom_call.1} parent=1 // pred_check
      _
    $region19: #{tpu_custom_call.1} parent=1 // pred_check_branch
      %44 = sbr.rel (0) target = $region21
    $region20: #{tpu_custom_call.1} parent=1 // pred_region
      %46 = dma.done [#allocation6], 1024
    $region21: #{tpu_custom_call.1} parent=1 // pred_fallthru
      _
    %v47 = vld [vmem:[#allocation2] sm:$0xf]
    %v48 = vld [vmem:[#allocation2 + $0x4] sm:$0xf]
    %v49 = vld [vmem:[#allocation5] sm:$0xf]
    %v50 = vld [vmem:[#allocation5 + $0x4] sm:$0xf]
    %v51 = vld [vmem:[#allocation5 + $0x8] sm:$0xf]
    %v52 = vld [vmem:[#allocation5 + $0xc] sm:$0xf]
    %v53 = vld [vmem:[#allocation5 + $0x10] sm:$0xf]
    %v54 = vld [vmem:[#allocation5 + $0x14] sm:$0xf]
    %v55 = vld [vmem:[#allocation5 + $0x18] sm:$0xf]
    %v56 = vld [vmem:[#allocation5 + $0x1c] sm:$0xf]
    %v57 = vld [vmem:[#allocation5 + $0x20] sm:$0xf]
    %v58 = vld [vmem:[#allocation5 + $0x24] sm:$0xf]
    %v59 = vld [vmem:[#allocation5 + $0x28] sm:$0xf]
    %v60 = vld [vmem:[#allocation5 + $0x2c] sm:$0xf]
    %v61 = vld [vmem:[#allocation5 + $0x30] sm:$0xf]
    %v62 = vld [vmem:[#allocation5 + $0x34] sm:$0xf]
    %v63 = vld [vmem:[#allocation5 + $0x38] sm:$0xf]
    %v64 = vld [vmem:[#allocation5 + $0x3c] sm:$0xf]
    %v65 = vld [vmem:[%s2] sm:$0x1]
    %v67 = vperm.slane %v65, 0
    %v71 = vunpack.c.l.b16 %v47
    %v72 = vunpack.c.l.b16 %v48
    %v73 = vpack.c.b16 %v72, %v71
    %v91 = vunpack.c.l.b16 %v49
    %v92 = vunpack.c.l.b16 %v50
    %v93 = vunpack.c.l.b16 %v51
    %v94 = vunpack.c.l.b16 %v52
    %v95 = vunpack.c.l.b16 %v53
    %v96 = vunpack.c.l.b16 %v54
    %v97 = vunpack.c.l.b16 %v55
    %v98 = vunpack.c.l.b16 %v56
    %v99 = vunpack.c.l.b16 %v57
    %v100 = vunpack.c.l.b16 %v58
    %v101 = vunpack.c.l.b16 %v59
    %v102 = vunpack.c.l.b16 %v60
    %v103 = vunpack.c.l.b16 %v61
    %v104 = vunpack.c.l.b16 %v62
    %v105 = vunpack.c.l.b16 %v63
    %v106 = vunpack.c.l.b16 %v64
    %v107 = vpack.c.b16 %v92, %v91
    %v108 = vpack.c.b16 %v94, %v93
    %v109 = vpack.c.b16 %v96, %v95
    %v110 = vpack.c.b16 %v98, %v97
    %v111 = vpack.c.b16 %v100, %v99
    %v112 = vpack.c.b16 %v102, %v101
    %v113 = vpack.c.b16 %v104, %v103
    %v114 = vpack.c.b16 %v106, %v105
    %123 = vmatpush.bf16.msra.mxu0 %v114
    %124 = vmatpush.bf16.msra.mxu0 %v113
    %125 = vmatpush.bf16.msra.mxu0 %v112
    %126 = vmatpush.bf16.msra.mxu0 %v111
    %127 = vmatpush.bf16.msra.mxu0 %v110
    %128 = vmatpush.bf16.msra.mxu0 %v109
    %129 = vmatpush.bf16.msra.mxu0 %v108
    %130 = vmatpush.bf16.msra.mxu0 %v107
    %131 = vmatmul.bf16.gmra.mxu0 %v73
    %v132 = vpop.f32.mrf.mxu0
    %v133 = vadd.f32 %v67, %v132
    %v134 = vpop.f32.mrf.mxu0
    %v135 = vadd.f32 %v67, %v134
    %136 = vdwg.mxu0
    %137 = vst [vmem:[#allocation7] sm:$0xff] %v133
    %138 = vst [vmem:[#allocation7 + $0x8] sm:$0xff] %v135
    // Predicated region
    $region22: #{tpu_custom_call.1} parent=1 // pred_check
      _
    $region23: #{tpu_custom_call.1} parent=1 // pred_check_branch
      %140 = sbr.rel (0) target = $region25
    $region24: #{tpu_custom_call.1} parent=1 // pred_region
      %142 = vsyncadd [#allocation4], 0
      %s143 = sshll.u32 [#allocation7], 4
      %s144 = int_to_ptr.vmem [resolvable:$true] %s143
      %s145 = sshll.u32 %s3, 4
      %s146 = int_to_ptr.hbm [resolvable:$true] %s145
      %151 = dma.vmem_to_hbm [thread:$0]  %s144, 256, %s146, [#allocation4], 128, 128, 8
    $region25: #{tpu_custom_call.1} parent=1 // pred_fallthru
      _
    // Predicated region
    $region26: #{tpu_custom_call.1} parent=1 // pred_check
      _
    $region27: #{tpu_custom_call.1} parent=1 // pred_check_branch
      %153 = sbr.rel (0) target = $region29
    $region28: #{tpu_custom_call.1} parent=1 // pred_region
      %155 = dma.done [#allocation4], 256
    $region29: #{tpu_custom_call.1} parent=1 // pred_fallthru
      _
    %156 = vsyncpa [#allocation3], 1
    %157 = vsyncpa [#allocation6], 1
    %158 = vsyncpa [#allocation4], 1

// kernel: tpu_custom_call.1
$region0: #{tpu_custom_call.1}
  #allocation0 [shape = 'u32[]', space=smem, size = 0x4, offset = 0x4, fixed_abs, tag = 'smem constant byte address 0x4 - core index']
  #allocation1 [shape = 'u32[72,128]{1,0:T(1,128)}', space=vmem, size = 0x9000, scoped, tag = 'internal scratch']
  %s0 = inlined_call_operand.hbm [shape: bf16[16,128], index: 0, kind: input, shape index: {}]
  %s1 = inlined_call_operand.hbm [shape: bf16[128,128], index: 1, kind: input, shape index: {}]
  %s2 = inlined_call_operand.vmem [shape: f32[1,128], index: 2, kind: input, shape index: {}]
  %s3 = inlined_call_operand.hbm [shape: f32[16,128], index: 3, kind: output, shape index: {}]
  %s4 = sld [smem:[#allocation0]]
  $region30: #{tpu_custom_call.1} parent=0
    _
  %s6 = ssub.s32 1, %s4
  %s7 = scalar_select 0, %s6, %s4
  $region1: #{tpu_custom_call.1} parent=0
    #allocation2 [shape = 'u8[4096]{0}', space=vmem, size = 0x1000, scoped, tag = 'input window, operand 0, single buffered']
    #allocation3 [shape = 's32[1]{0}', space=sflag, size = 0x4, scoped, tag = 'scoped memory for tpu_custom_call.1']
    #allocation4 [shape = 's32[1]{0}', space=sflag, size = 0x4, scoped, tag = 'scoped memory for tpu_custom_call.1']
    #allocation5 [shape = 'u8[32768]{0}', space=vmem, size = 0x8000, scoped, tag = 'input window, operand 1, single buffered']
    #allocation6 [shape = 's32[1]{0}', space=sflag, size = 0x4, scoped, tag = 'scoped memory for tpu_custom_call.1']
    #allocation7 [shape = 'u8[8192]{0}', space=vmem, size = 0x2000, scoped, tag = 'output window, operand 0, single buffered']
    %8 = vsyncpa [#allocation3], 0
    %9 = vsyncpa [#allocation6], 0
    %10 = vsyncpa [#allocation4], 0
    // Predicated region
    $region2: #{tpu_custom_call.1} parent=1 // pred_check
      _
    $region3: #{tpu_custom_call.1} parent=1 // pred_check_branch
      %12 = sbr.rel (0) target = $region5
    $region4: #{tpu_custom_call.1} parent=1 // pred_region
      %14 = vsyncadd [#allocation3], 0
      %s15 = sshll.u32 %s0, 4
      %s16 = int_to_ptr.hbm [resolvable:$true] %s15
      %s17 = sshll.u32 [#allocation2], 4
      %s18 = int_to_ptr.vmem [resolvable:$true] %s17
      %23 = dma.hbm_to_vmem [thread:$0]  %s16, 128, %s18, [#allocation3], 64, 64, 4
    $region5: #{tpu_custom_call.1} parent=1 // pred_fallthru
      _
    // Predicated region
    $region6: #{tpu_custom_call.1} parent=1 // pred_check
      _
    $region7: #{tpu_custom_call.1} parent=1 // pred_check_branch
      %25 = sbr.rel (0) target = $region9
    $region8: #{tpu_custom_call.1} parent=1 // pred_region
      %27 = vsyncadd [#allocation6], 0
      %s28 = sshll.u32 %s1, 4
      %s29 = int_to_ptr.hbm [resolvable:$true] %s28
      %s30 = sshll.u32 [#allocation5], 4
      %s31 = int_to_ptr.vmem [resolvable:$true] %s30
      %36 = dma.hbm_to_vmem [thread:$0]  %s29, 1024, %s31, [#allocation6], 64, 64, 4
    $region9: #{tpu_custom_call.1} parent=1 // pred_fallthru
      _
    // Predicated region
    $region10: #{tpu_custom_call.1} parent=1 // pred_check
      _
    $region11: #{tpu_custom_call.1} parent=1 // pred_check_branch
      %38 = sbr.rel (0) target = $region13
    $region12: #{tpu_custom_call.1} parent=1 // pred_region
      _
    $region13: #{tpu_custom_call.1} parent=1 // pred_fallthru
      _
    // Predicated region
    $region14: #{tpu_custom_call.1} parent=1 // pred_check
      _
    $region15: #{tpu_custom_call.1} parent=1 // pred_check_branch
      %40 = sbr.rel (0) target = $region17
    $region16: #{tpu_custom_call.1} parent=1 // pred_region
      %42 = dma.done [#allocation3], 128
    $region17: #{tpu_custom_call.1} parent=1 // pred_fallthru
      _
    // Predicated region
    $region18: #{tpu_custom_call.1} parent=1 // pred_check
      _
    $region19: #{tpu_custom_call.1} parent=1 // pred_check_branch
      %44 = sbr.rel (0) target = $region21
    $region20: #{tpu_custom_call.1} parent=1 // pred_region
      %46 = dma.done [#allocation6], 1024
    $region21: #{tpu_custom_call.1} parent=1 // pred_fallthru
      _
    %v47 = vld [vmem:[#allocation2] sm:$0xf]
    %v48 = vld [vmem:[#allocation2 + $0x4] sm:$0xf]
    %v49 = vld [vmem:[#allocation5] sm:$0xf]
    %v50 = vld [vmem:[#allocation5 + $0x4] sm:$0xf]
    %v51 = vld [vmem:[#allocation5 + $0x8] sm:$0xf]
    %v52 = vld [vmem:[#allocation5 + $0xc] sm:$0xf]
    %v53 = vld [vmem:[#allocation5 + $0x10] sm:$0xf]
    %v54 = vld [vmem:[#allocation5 + $0x14] sm:$0xf]
    %v55 = vld [vmem:[#allocation5 + $0x18] sm:$0xf]
    %v56 = vld [vmem:[#allocation5 + $0x1c] sm:$0xf]
    %v57 = vld [vmem:[#allocation5 + $0x20] sm:$0xf]
    %v58 = vld [vmem:[#allocation5 + $0x24] sm:$0xf]
    %v59 = vld [vmem:[#allocation5 + $0x28] sm:$0xf]
    %v60 = vld [vmem:[#allocation5 + $0x2c] sm:$0xf]
    %v61 = vld [vmem:[#allocation5 + $0x30] sm:$0xf]
    %v62 = vld [vmem:[#allocation5 + $0x34] sm:$0xf]
    %v63 = vld [vmem:[#allocation5 + $0x38] sm:$0xf]
    %v64 = vld [vmem:[#allocation5 + $0x3c] sm:$0xf]
    %v65 = vld [vmem:[%s2] sm:$0x1]
    %v67 = vperm.slane %v65, 0
    %v71 = vunpack.c.l.b16 %v47
    %v72 = vunpack.c.l.b16 %v48
    %v73 = vpack.c.b16 %v72, %v71
    %v91 = vunpack.c.l.b16 %v49
    %v92 = vunpack.c.l.b16 %v50
    %v93 = vunpack.c.l.b16 %v51
    %v94 = vunpack.c.l.b16 %v52
    %v95 = vunpack.c.l.b16 %v53
    %v96 = vunpack.c.l.b16 %v54
    %v97 = vunpack.c.l.b16 %v55
    %v98 = vunpack.c.l.b16 %v56
    %v99 = vunpack.c.l.b16 %v57
    %v100 = vunpack.c.l.b16 %v58
    %v101 = vunpack.c.l.b16 %v59
    %v102 = vunpack.c.l.b16 %v60
    %v103 = vunpack.c.l.b16 %v61
    %v104 = vunpack.c.l.b16 %v62
    %v105 = vunpack.c.l.b16 %v63
    %v106 = vunpack.c.l.b16 %v64
    %v107 = vpack.c.b16 %v92, %v91
    %v108 = vpack.c.b16 %v94, %v93
    %v109 = vpack.c.b16 %v96, %v95
    %v110 = vpack.c.b16 %v98, %v97
    %v111 = vpack.c.b16 %v100, %v99
    %v112 = vpack.c.b16 %v102, %v101
    %v113 = vpack.c.b16 %v104, %v103
    %v114 = vpack.c.b16 %v106, %v105
    %123 = vmatpush.bf16.msra.mxu0 %v114
    %124 = vmatpush.bf16.msra.mxu0 %v113
    %125 = vmatpush.bf16.msra.mxu0 %v112
    %126 = vmatpush.bf16.msra.mxu0 %v111
    %127 = vmatpush.bf16.msra.mxu0 %v110
    %128 = vmatpush.bf16.msra.mxu0 %v109
    %129 = vmatpush.bf16.msra.mxu0 %v108
    %130 = vmatpush.bf16.msra.mxu0 %v107
    %131 = vmatmul.bf16.gmra.mxu0 %v73
    %v132 = vpop.f32.mrf.mxu0
    %v133 = vadd.f32 %v67, %v132
    %v134 = vpop.f32.mrf.mxu0
    %v135 = vadd.f32 %v67, %v134
    %136 = vdwg.mxu0
    %137 = vst [vmem:[#allocation7] sm:$0xff] %v133
    %138 = vst [vmem:[#allocation7 + $0x8] sm:$0xff] %v135
    // Predicated region
    $region22: #{tpu_custom_call.1} parent=1 // pred_check
      _
    $region23: #{tpu_custom_call.1} parent=1 // pred_check_branch
      %140 = sbr.rel (0) target = $region25
    $region24: #{tpu_custom_call.1} parent=1 // pred_region
      %142 = vsyncadd [#allocation4], 0
      %s143 = sshll.u32 [#allocation7], 4
      %s144 = int_to_ptr.vmem [resolvable:$true] %s143
      %s145 = sshll.u32 %s3, 4
      %s146 = int_to_ptr.hbm [resolvable:$true] %s145
      %151 = dma.vmem_to_hbm [thread:$0]  %s144, 256, %s146, [#allocation4], 128, 128, 8
    $region25: #{tpu_custom_call.1} parent=1 // pred_fallthru
      _
    // Predicated region
    $region26: #{tpu_custom_call.1} parent=1 // pred_check
      _
    $region27: #{tpu_custom_call.1} parent=1 // pred_check_branch
      %153 = sbr.rel (0) target = $region29
    $region28: #{tpu_custom_call.1} parent=1 // pred_region
      %155 = dma.done [#allocation4], 256
    $region29: #{tpu_custom_call.1} parent=1 // pred_fallthru
      _
    %156 = vsyncpa [#allocation3], 1
    %157 = vsyncpa [#allocation6], 1
    %158 = vsyncpa [#allocation4], 1

</llo_original>
